<compile_context>
chip_gen: v7x
topology: tpu7x:2x2x1
jax: 0.10.0
libtpu: 0.0.40
codegen_flags: <defaults>
</compile_context>

<pallas_src>
import jax
import jax.numpy as jnp
from jax import lax
from jax.experimental import pallas as pl
from jax.experimental.pallas import tpu as pltpu

EPS = 1e-6


def _make_sum_kernel(TH, H):
    """Build the per-(batch, channel) pixel-sum kernel for row-tile size TH."""
    needs_mask = (H % TH) != 0

    def kernel(t_ref, out_ref, acc_ref):
        # t_ref  : VMEM block (1, 1, TH, W)   -- one row tile of one (b, c)
        # out_ref: VMEM block (1, 1, 8, 128)  -- per-(b, c) sum, written once
        # acc_ref: VMEM scratch (TH, W) f32   -- running elementwise accumulator
        h = pl.program_id(2)

        @pl.when(h == 0)
        def _init():
            acc_ref[...] = jnp.zeros_like(acc_ref)

        t = t_ref[0, 0].astype(jnp.float32)                # (TH, W)
        if needs_mask:  # zero the out-of-bounds rows of the last partial tile
            row = lax.broadcasted_iota(jnp.int32, t.shape, 0)
            t = jnp.where(h * TH + row < H, t, 0.0)
        acc_ref[...] += t                                  # pure VPU add / tile

        @pl.when(h == pl.num_programs(2) - 1)
        def _finalize():
            s = jnp.sum(acc_ref[...])                      # one XLU reduce/(b,c)
            # Broadcast the scalar into the full (8,128) tile -> unmasked store.
            out_ref[...] = jnp.full(out_ref.shape, s, dtype=jnp.float32)

    return kernel


def _choose_row_tile(H, W, itemsize, target_bytes=2 * 1024 * 1024):
    """Rows per block so one (TH, W) block is ~<= 2 MiB of VMEM (counting the
    lane padding of W up to a multiple of 128). With double-buffered input
    plus one f32 scratch this stays well inside every generation's scoped
    VMEM default."""
    w_pad = ((W + 127) // 128) * 128
    row_bytes = max(1, w_pad * itemsize)
    max_rows = max(8, target_bytes // row_bytes)
    if H <= max_rows:
        return H                                   # full dim: always legal
    return max(8, (min(max_rows, H) // 8) * 8)     # multiple of 8 sublanes


def dice_loss_vnet_forward(predicts, target, *, assume_one_hot=False):
    """predicts, target: (B, 2, H, W); target entries in {0, 1}.

    `predicts` is accepted for API parity with the PyTorch module but is
    algebraically irrelevant (softmax over a singleton channel == 1), so it
    is never streamed from HBM.

    If assume_one_hot=True the caller additionally guarantees
    target[:,0] + target[:,1] == 1 everywhere; the kernel then streams only
    channel 1 and derives the channel-0 sum algebraically (halves HBM reads).
    """
    B, C, H, W = target.shape
    assert C == 2, "Dice_Loss_Vnet expects 2 channels"
    assert predicts.shape == target.shape
    # TODO(synk): the host-side np.unique(target) in {0,1} assert of the
    # PyTorch code has no in-graph equivalent; values are assumed valid.

    itemsize = jnp.dtype(target.dtype).itemsize
    TH = _choose_row_tile(H, W, itemsize)
    n_h = pl.cdiv(H, TH)

    if assume_one_hot:
        c_grid = 1
        in_map = lambda b, c, h: (b, 1, h, 0)      # stream channel 1 only
    else:
        c_grid = 2
        in_map = lambda b, c, h: (b, c, h, 0)

    sums_tile = pl.pallas_call(
        _make_sum_kernel(TH, H),
        out_shape=jax.ShapeDtypeStruct((B, c_grid, 8, 128), jnp.float32),
        grid=(B, c_grid, n_h),
        in_specs=[pl.BlockSpec((1, 1, TH, W), in_map)],
        out_specs=pl.BlockSpec((1, 1, 8, 128), lambda b, c, h: (b, c, 0, 0)),
        scratch_shapes=[pltpu.VMEM((TH, W), jnp.float32)],
        compiler_params=pltpu.CompilerParams(
            dimension_semantics=("parallel", "parallel", "arbitrary")),
        cost_estimate=pl.CostEstimate(
            flops=B * c_grid * H * W,
            transcendentals=0,
            bytes_accessed=B * c_grid * H * W * itemsize
                           + B * c_grid * 8 * 128 * 4),
    )(target)

    # ---- tiny O(B) scalar glue (matches the PyTorch math exactly) ----
    sums = sums_tile[:, :, 0, 0]                   # (B, c_grid) per-batch sums
    hw_f = jnp.float32(H * W)
    if assume_one_hot:
        s1 = sums[:, 0]
        s0 = hw_f - s1
    else:
        s0, s1 = sums[:, 0], sums[:, 1]

    # class 0: target slice is (1 - t0);  num0 == den2_0 == H*W - sum(t0)
    num0 = hw_f - s0
    dice0 = 2.0 * num0 / (hw_f + num0 + EPS)       # den1 == H*W exactly
    # class 1: target slice is t1;        num1 == den2_1 == sum(t1)
    dice1 = 2.0 * s1 / (hw_f + s1 + EPS)

    loss0 = 1.0 - jnp.sum(dice0) / B
    loss1 = 1.0 - jnp.sum(dice1) / B
    return (loss0 + loss1) / 2.0


def _reference_loss(predicts, target, eps=EPS):
    """Pure-JAX reference: literal port of the PyTorch forward."""
    preds = jax.nn.softmax(predicts, axis=1)

    def dice_loss_vnet(pred_slice, tgt_slice):     # (B, 1, H, W) each
        probs = jax.nn.softmax(pred_slice, axis=1)  # singleton channel
        num = jnp.sum(probs * tgt_slice, axis=(2, 3))
        den1 = jnp.sum(probs * probs, axis=(2, 3))
        den2 = jnp.sum(tgt_slice * tgt_slice, axis=(2, 3))
        dice = 2.0 * num / (den1 + den2 + eps)
        return 1.0 - jnp.sum(dice) / dice.shape[0]

    l0 = dice_loss_vnet(preds[:, 0:1], 1.0 - target[:, 0:1])
    l1 = dice_loss_vnet(preds[:, 1:2], target[:, 1:2])
    return (l0 + l1) / 2.0


if __name__ == "__main__":
    B, C, H, W = 2, 2, 16, 16
    key = jax.random.PRNGKey(0)
    k_pred, k_lab = jax.random.split(key)

    predicts = jax.random.normal(k_pred, (B, C, H, W), dtype=jnp.float32)
    # target is a 0/1 one-hot over the channel dim
    labels = jax.random.randint(k_lab, (B, H, W), 0, C)
    target = jax.nn.one_hot(labels, C, dtype=jnp.float32)        # (B, H, W, C)
    target = jnp.transpose(target, (0, 3, 1, 2))                 # (B, C, H, W)

    loss = jax.jit(dice_loss_vnet_forward)(predicts, target)
    loss = jax.block_until_ready(loss)

    ref = _reference_loss(predicts, target)
    assert jnp.allclose(loss, ref, atol=1e-5, rtol=1e-5), (loss, ref)

    print("KERNEL_OK")
</pallas_src>

<mosaic_0001>
module attributes {stable_mosaic.version = 11 : i64} {
  func.func @kernel(%arg0: i32, %arg1: i32, %arg2: i32, %arg3: memref<1x1x16x16xf32, #tpu.memory_space<vmem>>, %arg4: memref<1x1x8x128xf32, #tpu.memory_space<vmem>>, %arg5: memref<16x16xf32, #tpu.memory_space<vmem>>) attributes {dimension_semantics = [#tpu.dimension_semantics<parallel>, #tpu.dimension_semantics<parallel>, #tpu.dimension_semantics<arbitrary>], iteration_bounds = array<i64: 2, 2, 1>, scalar_prefetch = 0 : i64, scratch_operands = 1 : i64, tpu.core_type = #tpu.core_type<tc>, window_params = [{transform_indices = @transform_0, window_bounds = array<i64: 1, 1, 16, 16>}, {transform_indices = @transform_1, window_bounds = array<i64: 1, 1, 8, 128>}]} {
    %c0_i32 = arith.constant 0 : i32
    %0 = arith.cmpi eq, %arg2, %c0_i32 : i32
    %1 = arith.extui %0 : i1 to i32
    %c0_i32_0 = arith.constant 0 : i32
    %2 = arith.cmpi ne, %1, %c0_i32_0 : i32
    scf.if %2 {
      %cst = arith.constant 0.000000e+00 : f32
      %11 = vector.broadcast %cst : f32 to vector<16x16xf32>
      %c0_10 = arith.constant 0 : index
      %c0_11 = arith.constant 0 : index
      %12 = vector.load %arg5[%c0_10, %c0_11] : memref<16x16xf32, #tpu.memory_space<vmem>>, vector<16x16xf32>
      tpu.vector_store %arg5[%c0_10, %c0_11], %11 {strides = array<i32>} : memref<16x16xf32, #tpu.memory_space<vmem>>, vector<16x16xf32>,
    } else {
    }
    %c0 = arith.constant 0 : index
    %c0_1 = arith.constant 0 : index
    %c0_2 = arith.constant 0 : index
    %c0_3 = arith.constant 0 : index
    %3 = vector.load %arg3[%c0, %c0_1, %c0_2, %c0_3] : memref<1x1x16x16xf32, #tpu.memory_space<vmem>>, vector<1x1x16x16xf32>
    %4 = vector.shape_cast %3 : vector<1x1x16x16xf32> to vector<16x16xf32>
    %c0_4 = arith.constant 0 : index
    %c0_5 = arith.constant 0 : index
    %5 = vector.load %arg5[%c0_4, %c0_5] : memref<16x16xf32, #tpu.memory_space<vmem>>, vector<16x16xf32>
    %6 = arith.addf %5, %4 : vector<16x16xf32>
    %c0_6 = arith.constant 0 : index
    %c0_7 = arith.constant 0 : index
    %7 = vector.load %arg5[%c0_6, %c0_7] : memref<16x16xf32, #tpu.memory_space<vmem>>, vector<16x16xf32>
    tpu.vector_store %arg5[%c0_6, %c0_7], %6 {strides = array<i32>} : memref<16x16xf32, #tpu.memory_space<vmem>>, vector<16x16xf32>,
    %c0_i32_8 = arith.constant 0 : i32
    %8 = arith.cmpi eq, %arg2, %c0_i32_8 : i32
    %9 = arith.extui %8 : i1 to i32
    %c0_i32_9 = arith.constant 0 : i32
    %10 = arith.cmpi ne, %9, %c0_i32_9 : i32
    scf.if %10 {
      %c0_10 = arith.constant 0 : index
      %c0_11 = arith.constant 0 : index
      %11 = vector.load %arg5[%c0_10, %c0_11] : memref<16x16xf32, #tpu.memory_space<vmem>>, vector<16x16xf32>
      %12 = vector.shape_cast %11 : vector<16x16xf32> to vector<1x16x16xf32>
      %cst = arith.constant dense<0.000000e+00> : vector<1xf32>
      %13 = vector.multi_reduction <add>, %12, %cst [1, 2] : vector<1x16x16xf32> to vector<1xf32>
      %14 = vector.shape_cast %13 : vector<1xf32> to vector<1x1x1xf32>
      %15 = vector.extract %14[0, 0, 0] : f32 from vector<1x1x1xf32>
      %16 = vector.broadcast %15 : f32 to vector<1x1x8x128xf32>
      %c0_12 = arith.constant 0 : index
      %c0_13 = arith.constant 0 : index
      %c0_14 = arith.constant 0 : index
      %c0_15 = arith.constant 0 : index
      %17 = vector.load %arg4[%c0_12, %c0_13, %c0_14, %c0_15] : memref<1x1x8x128xf32, #tpu.memory_space<vmem>>, vector<1x1x8x128xf32>
      tpu.vector_store %arg4[%c0_12, %c0_13, %c0_14, %c0_15], %16 {strides = array<i32>} : memref<1x1x8x128xf32, #tpu.memory_space<vmem>>, vector<1x1x8x128xf32>,
    } else {
    }
    return
  }
  func.func @transform_0(%arg0: i32, %arg1: i32, %arg2: i32) -> (i32, i32, i32, i32) {
    %c0_i32 = arith.constant 0 : i32
    %c0_i32_0 = arith.constant 0 : i32
    return %arg0, %arg1, %arg2, %c0_i32 : i32, i32, i32, i32
  }
  func.func @transform_1(%arg0: i32, %arg1: i32, %arg2: i32) -> (i32, i32, i32, i32) {
    %c0_i32 = arith.constant 0 : i32
    %c0_i32_0 = arith.constant 0 : i32
    %c0_i32_1 = arith.constant 0 : i32
    return %arg0, %arg1, %c0_i32, %c0_i32_0 : i32, i32, i32, i32
  }
}

</mosaic_0001>

<llo_original>
// kernel: dice_loss_vnet_forward.1
$region0: #{dice_loss_vnet_forward.1}
  #allocation0 [shape = 'u32[]', space=smem, size = 0x4, offset = 0x4, fixed_abs, tag = 'smem constant byte address 0x4 - core index']
  #allocation1 [shape = 'u32[144,128]{1,0:T(1,128)}', space=vmem, size = 0x12000, scoped, tag = 'internal scratch']
  #allocation2 [shape = 'f32[16,16]{1,0:T(8,128)}', space=vmem, size = 0x2000, scoped, tag = 'scratch operand']
  %s0 = inlined_call_operand.hbm [shape: f32[2,2,16,16], index: 0, kind: input, shape index: {}]
  %s1 = inlined_call_operand.vmem [shape: f32[2,2,8,128], index: 1, kind: output, shape index: {}]
  %s2 = sld [smem:[#allocation0]]
  $region49: #{dice_loss_vnet_forward.1} parent=0
    _
  %s4 = ssub.s32 1, %s2
  %s5 = scalar_select 0, %s4, %s2
  $region1: #{dice_loss_vnet_forward.1} parent=0
    #allocation3 [shape = 'u8[16384]{0}', space=vmem, size = 0x4000, scoped, tag = 'input window, operand 0']
    #allocation4 [shape = 's32[2]{0}', space=sflag, size = 0x8, scoped, tag = 'scoped memory for dice_loss_vnet_forward.1']
    %6 = vsyncpa [#allocation4], 0
    %s7 = scalar_lea.sflag [#allocation4], 1
    %8 = vsyncpa %s7, 0
    loop: start=0, step=1, limit=6
    $region2: #{dice_loss_vnet_forward.1} parent=1 // loop_pre_header
      _
    $region3: #{dice_loss_vnet_forward.1} parent=1 // loop_header
      %s10 = sphi 0, %s14
      %p11 = scmp.ge.s32.totalorder %s10, 6
      %s17 = sphi 0, %s36
      %s18 = sphi 0, %s32
      %s19 = sphi 0, %s28
      %s20 = sphi 0, %s17
      %s21 = sphi 0, %s18
      %s22 = sphi 0, %s19
      %s23 = sphi 0, %s20
      %s24 = sphi 0, %s21
      %s25 = sphi 0, %s22
      %s43 = sphi 0, %s45
      %s46 = sphi 0, %s43
      %s47 = sphi 0, %s46
      %s63 = sphi 0, %s47
      %s71 = sphi 0, %s73
      %s74 = sphi 0, %s71
      %s75 = sphi 0, %s74
      %s91 = sphi 0, %s75
    $region4: #{dice_loss_vnet_forward.1} parent=1 // loop_header_branch
      %13 = sbr.rel (%p11) target = $region8
    $region5: #{dice_loss_vnet_forward.1} parent=1 // loop_body
      %s15 = ssub.s32 %s10, 1
      %s16 = ssub.s32 %s10, 2
      %s26 = sadd.s32 1, %s19
      %p27 = scmp.ge.s32.totalorder %s26, 1
      %s28 = scalar_select %p27, 0, %s26
      %s29 = sadd.s32 1, %s18
      %s30 = scalar_select %p27, %s29, %s18
      %p31 = scmp.ge.s32.totalorder %s30, 2
      %s32 = scalar_select %p31, 0, %s30
      %s33 = sadd.s32 1, %s17
      %s34 = scalar_select %p31, %s33, %s17
      %p35 = scmp.ge.s32.totalorder %s34, 2
      %s36 = scalar_select %p35, 0, %s34
      %s37 = ssub.s32 %s17, %s36
      %s38 = ssub.s32 %s18, %s32
      %s39 = sor.u32 %s37, %s38
      %s40 = ssub.s32 %s19, %s28
      %s41 = sor.u32 %s39, %s40
      %p42 = scmp.eq.s32.totalorder %s41, 0
      %s44 = sadd.s32 %s43, 1
      %s45 = scalar_select %p42, %s43, %s44
      %p48 = pneg %p42
      %p49 = scmp.eq.s32.totalorder %s10, 3
      %p50 = por %p48, %p49
      %p51 = scmp.ne.s32.totalorder %s43, %s46
      %p52 = scmp.eq.s32.totalorder %s10, 0
      %p53 = por %p51, %p52
      %p54 = scmp.ne.s32.totalorder %s43, %s46
      %p55 = scmp.eq.s32.totalorder %s15, 3
      %p56 = por %p54, %p55
      %p57 = scmp.ne.s32.totalorder %s46, %s47
      %p58 = scmp.eq.s32.totalorder %s15, 0
      %p59 = por %p57, %p58
      %p60 = scmp.ne.s32.totalorder %s46, %s47
      %p61 = scmp.eq.s32.totalorder %s16, 3
      %p62 = por %p60, %p61
      %p64 = scmp.ne.s32.totalorder %s47, %s63
      %p65 = scmp.eq.s32.totalorder %s16, 0
      %p66 = por %p64, %p65
      %s67 = ssub.s32 %s17, %s36
      %s68 = ssub.s32 %s18, %s32
      %s69 = sor.u32 %s67, %s68
      %p70 = scmp.eq.s32.totalorder %s69, 0
      %s72 = sadd.s32 %s71, 1
      %s73 = scalar_select %p70, %s71, %s72
      %p76 = pneg %p70
      %p77 = scmp.eq.s32.totalorder %s10, 3
      %p78 = por %p76, %p77
      %p79 = scmp.ne.s32.totalorder %s71, %s74
      %p80 = scmp.eq.s32.totalorder %s10, 0
      %p81 = por %p79, %p80
      %p82 = scmp.ne.s32.totalorder %s71, %s74
      %p83 = scmp.eq.s32.totalorder %s15, 3
      %p84 = por %p82, %p83
      %p85 = scmp.ne.s32.totalorder %s74, %s75
      %p86 = scmp.eq.s32.totalorder %s15, 0
      %p87 = por %p85, %p86
      %p88 = scmp.ne.s32.totalorder %s74, %s75
      %p89 = scmp.eq.s32.totalorder %s16, 3
      %p90 = por %p88, %p89
      %p92 = scmp.ne.s32.totalorder %s75, %s91
      %p93 = scmp.eq.s32.totalorder %s16, 0
      %p94 = por %p92, %p93
      %p95 = scmp.le.s32.totalorder 1, %s10
      %p96 = scmp.lt.s32.totalorder %s10, 5
      %p97 = pnand %p95, %p96
      %p98 = pneg %p97
      // Predicated region
      $region9: #{dice_loss_vnet_forward.1} parent=5 // pred_check
        _
      $region10: #{dice_loss_vnet_forward.1} parent=5 // pred_check_branch
        %100 = sbr.rel (%p97) target = $region12
      $region11: #{dice_loss_vnet_forward.1} parent=5 // pred_region
        %s101 = ssub.s32 %s10, 1
      $region12: #{dice_loss_vnet_forward.1} parent=5 // pred_fallthru
        _
      %p102 = scmp.lt.s32.totalorder %s10, 4
      // Predicated region
      $region13: #{dice_loss_vnet_forward.1} parent=5 // pred_check
        %p103 = pneg %p102
      $region14: #{dice_loss_vnet_forward.1} parent=5 // pred_check_branch
        %105 = sbr.rel (%p103) target = $region16
      $region15: #{dice_loss_vnet_forward.1} parent=5 // pred_region
        // Predicated region
        $region17: #{dice_loss_vnet_forward.1} parent=15 // pred_check
          %p106 = pneg %p53
        $region18: #{dice_loss_vnet_forward.1} parent=15 // pred_check_branch
          %108 = sbr.rel (%p106) target = $region20
        $region19: #{dice_loss_vnet_forward.1} parent=15 // pred_region
          %s109 = sand.u32 %s43, 1
          %s110 = scalar_lea.sflag [#allocation4], %s109
          %s111 = sand.u32 %s43, 1
          %s112 = smul.addr %s111, 16
          %s113 = scalar_lea.vmem [#allocation3], %s112
          %s114 = smul.u32 2, %s19
          %s116 = ssub.s32 256, 256
          %117 = vsyncadd %s110, %s116
          %s118 = smul.addr %s18, 2
          %s119 = sadd.s32 %s114, %s118
          %s120 = smul.addr %s17, 4
          %s121 = sadd.s32 %s119, %s120
          %s122 = smul.addr %s121, 128
          %s123 = scalar_lea.hbm %s0, %s122
          %s124 = sshll.u32 %s113, 4
          %s125 = int_to_ptr.vmem [resolvable:$true] %s124
          %130 = dma.hbm_to_vmem [thread:$0]  %s123, 256, %s125, %s110, 128, 128, 8
        $region20: #{dice_loss_vnet_forward.1} parent=15 // pred_fallthru
          _
      $region16: #{dice_loss_vnet_forward.1} parent=5 // pred_fallthru
        _
      %p131 = scmp.le.s32.totalorder 1, %s10
      %p132 = scmp.lt.s32.totalorder %s10, 5
      %p133 = pnand %p131, %p132
      %p134 = pneg %p133
      // Predicated region
      $region21: #{dice_loss_vnet_forward.1} parent=5 // pred_check
        _
      $region22: #{dice_loss_vnet_forward.1} parent=5 // pred_check_branch
        %136 = sbr.rel (%p133) target = $region24
      $region23: #{dice_loss_vnet_forward.1} parent=5 // pred_region
        %s137 = ssub.s32 %s10, 1
        %s138 = sand.u32 %s46, 1
        %s139 = scalar_lea.sflag [#allocation4], %s138
        %s140 = sand.u32 %s46, 1
        %s141 = smul.addr %s140, 16
        %s142 = scalar_lea.vmem [#allocation3], %s141
        // Predicated region
        $region25: #{dice_loss_vnet_forward.1} parent=23 // pred_check
          %p143 = pneg %p59
        $region26: #{dice_loss_vnet_forward.1} parent=23 // pred_check_branch
          %145 = sbr.rel (%p143) target = $region28
        $region27: #{dice_loss_vnet_forward.1} parent=23 // pred_region
          %146 = dma.done %s139, 256
        $region28: #{dice_loss_vnet_forward.1} parent=23 // pred_fallthru
          _
        %s147 = sand.u32 %s46, 1
        %s148 = scalar_lea.sflag [#allocation4], %s147
        %s149 = sand.u32 %s46, 1
        %s150 = smul.addr %s149, 16
        %s151 = scalar_lea.vmem [#allocation3], %s150
        %p152 = pneg %p59
        %p153 = pneg %p56
        %p154 = pneg %p87
        %p155 = pneg %p84
        %p156 = scmp.lt.s32.totalorder %s20, 1
        %s157 = scalar_select %p156, %s20, 1
        %p158 = scmp.lt.s32.totalorder %s21, 1
        %s159 = scalar_select %p158, %s21, 1
        %s160 = smul.addr %s157, 2
        %s161 = sadd.s32 %s159, %s160
        %s162 = smul.addr %s161, 8
        %s163 = scalar_lea.vmem %s1, %s162
        %s164 = smul.u32 2, %s22
        %p165 = scmp.lt.s32.totalorder %s20, 1
        %s166 = scalar_select %p165, %s20, 1
        %p167 = scmp.lt.s32.totalorder %s21, 1
        %s168 = scalar_select %p167, %s21, 1
        %s169 = smul.addr %s166, 2
        %s170 = sadd.s32 %s168, %s169
        %s171 = smul.addr %s170, 8
        %s172 = scalar_lea.vmem %s1, %s171
        %p173 = scmp.eq.s32.totalorder %s22, 0
        // Predicated region
        $region29: #{dice_loss_vnet_forward.1} parent=23 // pred_check
          %p174 = pneg %p173
        $region30: #{dice_loss_vnet_forward.1} parent=23 // pred_check_branch
          %176 = sbr.rel (%p174) target = $region32
        $region31: #{dice_loss_vnet_forward.1} parent=23 // pred_region
          %vm177 = vcmask 130048
          %178 = vst.msk [vmem:[#allocation2] sm:$0xff] %vm177, 0.0
          %179 = vst.msk [vmem:[#allocation2 + $0x8] sm:$0xff] %vm177, 0.0
        $region32: #{dice_loss_vnet_forward.1} parent=23 // pred_fallthru
          _
        %v180 = vld [vmem:[%s142] sm:$0xff]
        %v181 = vld [vmem:[%s142 + $0x8] sm:$0xff]
        %v182 = vld [vmem:[#allocation2] sm:$0xff]
        %v183 = vld [vmem:[#allocation2 + $0x8] sm:$0xff]
        %v184 = vadd.f32 %v182, %v180
        %v185 = vadd.f32 %v183, %v181
        %vm186 = vcmask 130048
        %187 = vst.msk [vmem:[#allocation2] sm:$0xff] %vm186, %v184
        %188 = vst.msk [vmem:[#allocation2 + $0x8] sm:$0xff] %vm186, %v185
        // Predicated region
        $region33: #{dice_loss_vnet_forward.1} parent=23 // pred_check
          %p189 = pneg %p173
        $region34: #{dice_loss_vnet_forward.1} parent=23 // pred_check_branch
          %191 = sbr.rel (%p189) target = $region36
        $region35: #{dice_loss_vnet_forward.1} parent=23 // pred_region
          %v192 = vld [vmem:[#allocation2] sm:$0xff]
          %v193 = vld [vmem:[#allocation2 + $0x8] sm:$0xff]
          %v194 = vsel %vm186, %v192, 0.0
          %v195 = vsel %vm186, %v193, 0.0
          %v196 = vadd.f32 %v194, %v195
          %197 = vadd.xlane.f32.xlu0 %v196
          %v198 = vpop.xlane.xlu0 %197
          %v199 = vrot.slane %v198, 4
          %v200 = vadd.f32 %v198, %v199
          %v201 = vrot.slane %v200, 2
          %v202 = vadd.f32 %v200, %v201
          %v203 = vrot.slane %v202, 1
          %v204 = vadd.f32 %v202, %v203
          %s205 = vtos %v204
          %v206 = vstv %s205
          %207 = vst [vmem:[%s172] sm:$0xff] %v206
        $region36: #{dice_loss_vnet_forward.1} parent=23 // pred_fallthru
          _
        %p208 = scmp.lt.s32.totalorder %s20, 1
        %s209 = scalar_select %p208, %s20, 1
        %p210 = scmp.lt.s32.totalorder %s21, 1
        %s211 = scalar_select %p210, %s21, 1
        %s212 = smul.addr %s209, 2
        %s213 = sadd.s32 %s211, %s212
        %s214 = smul.addr %s213, 8
        %s215 = scalar_lea.vmem %s1, %s214
        // Predicated region
        $region37: #{dice_loss_vnet_forward.1} parent=23 // pred_check
          %p216 = pneg %p84
        $region38: #{dice_loss_vnet_forward.1} parent=23 // pred_check_branch
          %218 = sbr.rel (%p216) target = $region40
        $region39: #{dice_loss_vnet_forward.1} parent=23 // pred_region
          _
        $region40: #{dice_loss_vnet_forward.1} parent=23 // pred_fallthru
          _
      $region24: #{dice_loss_vnet_forward.1} parent=5 // pred_fallthru
        _
      %p219 = scmp.le.s32.totalorder 2, %s10
      // Predicated region
      $region41: #{dice_loss_vnet_forward.1} parent=5 // pred_check
        %p220 = pneg %p219
      $region42: #{dice_loss_vnet_forward.1} parent=5 // pred_check_branch
        %222 = sbr.rel (%p220) target = $region44
      $region43: #{dice_loss_vnet_forward.1} parent=5 // pred_region
        %s223 = ssub.s32 %s10, 2
        // Predicated region
        $region45: #{dice_loss_vnet_forward.1} parent=43 // pred_check
          %p224 = pneg %p90
        $region46: #{dice_loss_vnet_forward.1} parent=43 // pred_check_branch
          %226 = sbr.rel (%p224) target = $region48
        $region47: #{dice_loss_vnet_forward.1} parent=43 // pred_region
          %p227 = scmp.lt.s32.totalorder %s23, 1
          %s228 = scalar_select %p227, %s23, 1
          %p229 = scmp.lt.s32.totalorder %s24, 1
          %s230 = scalar_select %p229, %s24, 1
          %s231 = smul.addr %s228, 2
          %s232 = sadd.s32 %s230, %s231
          %s233 = smul.addr %s232, 8
          %s234 = scalar_lea.vmem %s1, %s233
        $region48: #{dice_loss_vnet_forward.1} parent=43 // pred_fallthru
          _
      $region44: #{dice_loss_vnet_forward.1} parent=5 // pred_fallthru
        _
    $region6: #{dice_loss_vnet_forward.1} parent=1 // loop_footer
      %s14 = sadd.s32 1, %s10
    $region7: #{dice_loss_vnet_forward.1} parent=1 // loop_footer_branch
      %9 = sbr.rel target = $region3
    $region8: #{dice_loss_vnet_forward.1} parent=1 // loop_exit
      _
    %235 = vsyncpa [#allocation4], 1
    %s236 = scalar_lea.sflag [#allocation4], 1
    %237 = vsyncpa %s236, 1

</llo_original>
